<compile_context>
chip_gen: v7x
topology: tpu7x:2x2x1
jax: 0.10.0
libtpu: 0.0.40
codegen_flags: <defaults>
</compile_context>

<pallas_src>
import functools

import jax
import jax.numpy as jnp
from jax.experimental import pallas as pl
from jax.experimental.pallas import tpu as pltpu


def _round_up(x, m):
    return ((x + m - 1) // m) * m


def _residual_linear_kernel(x_ref, w_ref, b_ref, o_ref, acc_ref):
    """Grid point (i, j, k):
        acc[i,j] += x[i,k] @ W[k,j]            (bf16 MXU, f32 accumulate)
        acc[i,j] += x[i,k]        when k == j  (f32 residual, square Linear)
        out[i,j]  = acc + b[j]    on last k    (f32 bias, single write)
    """
    j = pl.program_id(1)
    k = pl.program_id(2)

    @pl.when(k == 0)
    def _init():
        acc_ref[...] = jnp.zeros_like(acc_ref)

    x = x_ref[...]                                      # (TM, TK) f32
    acc_ref[...] += jnp.dot(x.astype(jnp.bfloat16), w_ref[...],
                            preferred_element_type=jnp.float32)

    @pl.when(k == j)
    def _residual():
        acc_ref[...] += x                               # f32 residual add

    @pl.when(k == pl.num_programs(2) - 1)
    def _epilogue():
        o_ref[...] = (acc_ref[...] + b_ref[...]).astype(o_ref.dtype)


def residual_linear(x, w, b, *, tm=512, tk=None):
    """Residual(Linear)(x) = x @ w + b + x, fused in one Pallas TPU kernel.

    x: (B, N, D) f32 ; w: (D, D) f32 ; b: (D,) f32.
    tm: rows per M tile (multiple of 8, default 512).
    tk: contraction / output-column tile (multiple of 128 dividing padded D).
    """
    B, N, D = x.shape
    M = B * N

    # ---- lane-dense / sublane-aligned sizes --------------------------------
    Dp = _round_up(max(D, 128), 128)                    # lane axis: mult of 128
    if tk is None:
        tk = next(t for t in (512, 256, 128) if Dp % t == 0)
    assert tk % 128 == 0 and Dp % tk == 0, "tk must be a 128-multiple dividing padded D"
    tm = max(8, min(_round_up(tm, 8), _round_up(M, 8)))  # sublane: mult of 8
    Mp = _round_up(M, tm)

    # ---- pad operands (no-op when already aligned) --------------------------
    x2 = x.reshape(M, D)
    if (Mp, Dp) != (M, D):
        x2 = jnp.pad(x2, ((0, Mp - M), (0, Dp - D)))
    w2 = w if Dp == D else jnp.pad(w, ((0, Dp - D), (0, Dp - D)))
    w2 = w2.astype(jnp.bfloat16)                        # bf16 MXU path, half W bytes
    b2 = (b if Dp == D else jnp.pad(b, (0, Dp - D))).reshape(1, Dp)

    grid = (Mp // tm, Dp // tk, Dp // tk)               # (M tiles, N tiles, K tiles)

    # double-buffered x/W/b/out blocks + f32 accumulator scratch
    vmem_need = (2 * tm * tk * 4 + 2 * tk * tk * 2 + 2 * tk * 4
                 + 2 * tm * tk * 4 + tm * tk * 4)

    out2 = pl.pallas_call(
        _residual_linear_kernel,
        out_shape=jax.ShapeDtypeStruct((Mp, Dp), x.dtype),
        grid_spec=pltpu.PrefetchScalarGridSpec(
            num_scalar_prefetch=0,
            grid=grid,
            in_specs=[
                pl.BlockSpec((tm, tk), lambda i, j, k: (i, k)),   # x tile
                pl.BlockSpec((tk, tk), lambda i, j, k: (k, j)),   # W tile
                pl.BlockSpec((1, tk), lambda i, j, k: (0, j)),    # bias tile
            ],
            out_specs=pl.BlockSpec((tm, tk), lambda i, j, k: (i, j)),
            scratch_shapes=[pltpu.VMEM((tm, tk), jnp.float32)],
        ),
        compiler_params=pltpu.CompilerParams(
            # M and output-column tiles are independent → shard across TCs (v7x);
            # K is a reduction into the accumulator → arbitrary (innermost).
            dimension_semantics=("parallel", "parallel", "arbitrary"),
            vmem_limit_bytes=int(min(max(vmem_need + (8 << 20), 16 << 20), 64 << 20)),
        ),
    )(x2, w2, b2)

    return out2[:M, :D].reshape(B, N, D)


def _reference(x, w, b):
    """Matches kernel numerics: bf16-rounded MXU inputs, f32 accumulate,
    f32 bias + f32 residual."""
    xb = x.astype(jnp.bfloat16).astype(jnp.float32)
    wb = w.astype(jnp.bfloat16).astype(jnp.float32)
    return jnp.einsum("bnd,de->bne", xb, wb) + b + x


if __name__ == "__main__":
    key = jax.random.PRNGKey(0)

    # --- test 1: small shapes consistent with the module (batch=2, seq=8, dim=32)
    B, N, D = 2, 8, 32
    kx, kw, kb, k2 = jax.random.split(key, 4)
    x = jax.random.normal(kx, (B, N, D), dtype=jnp.float32)
    w = jax.random.normal(kw, (D, D), dtype=jnp.float32) * (1.0 / (D ** 0.5))
    b = jax.random.normal(kb, (D,), dtype=jnp.float32) * 0.01

    out = residual_linear(x, w, b)
    jax.block_until_ready(out)
    assert out.shape == x.shape
    assert jnp.allclose(out, _reference(x, w, b), atol=2e-3, rtol=2e-3), \
        "mismatch vs bf16-matmul reference"
    ref_f32 = jnp.einsum("bnd,de->bne", x, w) + b + x
    assert jnp.allclose(out, ref_f32, atol=5e-2, rtol=5e-2), "mismatch vs f32 reference"

    # --- test 2: exercise multi-tile grid + padding (M and K/N tiling, tail pads)
    B2, N2, D2 = 2, 40, 200           # M=80 (padded to 96 with tm=32), D->256
    kx2, kw2, kb2 = jax.random.split(k2, 3)
    x2 = jax.random.normal(kx2, (B2, N2, D2), dtype=jnp.float32)
    w2 = jax.random.normal(kw2, (D2, D2), dtype=jnp.float32) * (1.0 / (D2 ** 0.5))
    b2 = jax.random.normal(kb2, (D2,), dtype=jnp.float32) * 0.01

    out2 = residual_linear(x2, w2, b2, tm=32, tk=128)   # grid = (3, 2, 2)
    jax.block_until_ready(out2)
    assert out2.shape == x2.shape
    assert jnp.allclose(out2, _reference(x2, w2, b2), atol=2e-3, rtol=2e-3), \
        "mismatch vs bf16-matmul reference (tiled case)"

    print("KERNEL_OK")
</pallas_src>

<mosaic_0001>
module attributes {stable_mosaic.version = 11 : i64} {
  func.func @_residual_linear_kernel(%arg0: i32, %arg1: i32, %arg2: i32, %arg3: memref<16x128xf32, #tpu.memory_space<vmem>>, %arg4: memref<128x128xbf16, #tpu.memory_space<vmem>>, %arg5: memref<1x128xf32, #tpu.memory_space<vmem>>, %arg6: memref<16x128xf32, #tpu.memory_space<vmem>>, %arg7: memref<16x128xf32, #tpu.memory_space<vmem>>) attributes {dimension_semantics = [#tpu.dimension_semantics<parallel>, #tpu.dimension_semantics<parallel>, #tpu.dimension_semantics<arbitrary>], iteration_bounds = array<i64: 1, 1, 1>, scalar_prefetch = 0 : i64, scratch_operands = 1 : i64, tpu.core_type = #tpu.core_type<tc>, window_params = [{transform_indices = @transform_0, window_bounds = array<i64: 16, 128>}, {transform_indices = @transform_1, window_bounds = array<i64: 128, 128>}, {transform_indices = @transform_2, window_bounds = array<i64: 1, 128>}, {transform_indices = @transform_3, window_bounds = array<i64: 16, 128>}]} {
    %c0_i32 = arith.constant 0 : i32
    %0 = arith.cmpi eq, %arg2, %c0_i32 : i32
    %1 = arith.extui %0 : i1 to i32
    %c0_i32_0 = arith.constant 0 : i32
    %2 = arith.cmpi ne, %1, %c0_i32_0 : i32
    scf.if %2 {
      %cst_11 = arith.constant 0.000000e+00 : f32
      %16 = vector.broadcast %cst_11 : f32 to vector<16x128xf32>
      %c0_12 = arith.constant 0 : index
      %c0_13 = arith.constant 0 : index
      %17 = vector.load %arg7[%c0_12, %c0_13] : memref<16x128xf32, #tpu.memory_space<vmem>>, vector<16x128xf32>
      tpu.vector_store %arg7[%c0_12, %c0_13], %16 {strides = array<i32>} : memref<16x128xf32, #tpu.memory_space<vmem>>, vector<16x128xf32>,
    } else {
    }
    %c0 = arith.constant 0 : index
    %c0_1 = arith.constant 0 : index
    %3 = vector.load %arg3[%c0, %c0_1] : memref<16x128xf32, #tpu.memory_space<vmem>>, vector<16x128xf32>
    %c0_2 = arith.constant 0 : index
    %c0_3 = arith.constant 0 : index
    %4 = vector.load %arg7[%c0_2, %c0_3] : memref<16x128xf32, #tpu.memory_space<vmem>>, vector<16x128xf32>
    %5 = arith.truncf %3 : vector<16x128xf32> to vector<16x128xbf16>
    %c0_4 = arith.constant 0 : index
    %c0_5 = arith.constant 0 : index
    %6 = vector.load %arg4[%c0_4, %c0_5] : memref<128x128xbf16, #tpu.memory_space<vmem>>, vector<128x128xbf16>
    %cst = arith.constant dense<0.000000e+00> : vector<16x128xf32>
    %7 = tpu.matmul %5, %6, %cst {dimension_numbers = #tpu.dot_dimension_numbers<[1], [0], [0], [1], [0, 0, 1, 1], [], []>} : vector<16x128xbf16>, vector<128x128xbf16>, vector<16x128xf32> -> vector<16x128xf32>
    %8 = arith.addf %4, %7 : vector<16x128xf32>
    %c0_6 = arith.constant 0 : index
    %c0_7 = arith.constant 0 : index
    %9 = vector.load %arg7[%c0_6, %c0_7] : memref<16x128xf32, #tpu.memory_space<vmem>>, vector<16x128xf32>
    tpu.vector_store %arg7[%c0_6, %c0_7], %8 {strides = array<i32>} : memref<16x128xf32, #tpu.memory_space<vmem>>, vector<16x128xf32>,
    %10 = arith.cmpi eq, %arg2, %arg1 : i32
    %11 = arith.extui %10 : i1 to i32
    %c0_i32_8 = arith.constant 0 : i32
    %12 = arith.cmpi ne, %11, %c0_i32_8 : i32
    scf.if %12 {
      %c0_11 = arith.constant 0 : index
      %c0_12 = arith.constant 0 : index
      %16 = vector.load %arg7[%c0_11, %c0_12] : memref<16x128xf32, #tpu.memory_space<vmem>>, vector<16x128xf32>
      %17 = arith.addf %16, %3 : vector<16x128xf32>
      %c0_13 = arith.constant 0 : index
      %c0_14 = arith.constant 0 : index
      %18 = vector.load %arg7[%c0_13, %c0_14] : memref<16x128xf32, #tpu.memory_space<vmem>>, vector<16x128xf32>
      tpu.vector_store %arg7[%c0_13, %c0_14], %17 {strides = array<i32>} : memref<16x128xf32, #tpu.memory_space<vmem>>, vector<16x128xf32>,
    } else {
    }
    %c0_i32_9 = arith.constant 0 : i32
    %13 = arith.cmpi eq, %arg2, %c0_i32_9 : i32
    %14 = arith.extui %13 : i1 to i32
    %c0_i32_10 = arith.constant 0 : i32
    %15 = arith.cmpi ne, %14, %c0_i32_10 : i32
    scf.if %15 {
      %c0_11 = arith.constant 0 : index
      %c0_12 = arith.constant 0 : index
      %16 = vector.load %arg7[%c0_11, %c0_12] : memref<16x128xf32, #tpu.memory_space<vmem>>, vector<16x128xf32>
      %c0_13 = arith.constant 0 : index
      %c0_14 = arith.constant 0 : index
      %17 = vector.load %arg5[%c0_13, %c0_14] : memref<1x128xf32, #tpu.memory_space<vmem>>, vector<1x128xf32>
      %18 = vector.broadcast %17 : vector<1x128xf32> to vector<16x128xf32>
      %19 = arith.addf %16, %18 : vector<16x128xf32>
      %c0_15 = arith.constant 0 : index
      %c0_16 = arith.constant 0 : index
      %20 = vector.load %arg6[%c0_15, %c0_16] : memref<16x128xf32, #tpu.memory_space<vmem>>, vector<16x128xf32>
      tpu.vector_store %arg6[%c0_15, %c0_16], %19 {strides = array<i32>} : memref<16x128xf32, #tpu.memory_space<vmem>>, vector<16x128xf32>,
    } else {
    }
    return
  }
  func.func @transform_0(%arg0: i32, %arg1: i32, %arg2: i32) -> (i32, i32) {
    %c0_i32 = arith.constant 0 : i32
    return %arg0, %arg2 : i32, i32
  }
  func.func @transform_1(%arg0: i32, %arg1: i32, %arg2: i32) -> (i32, i32) {
    %c0_i32 = arith.constant 0 : i32
    return %arg2, %arg1 : i32, i32
  }
  func.func @transform_2(%arg0: i32, %arg1: i32, %arg2: i32) -> (i32, i32) {
    %c0_i32 = arith.constant 0 : i32
    %c0_i32_0 = arith.constant 0 : i32
    return %c0_i32, %arg1 : i32, i32
  }
  func.func @transform_3(%arg0: i32, %arg1: i32, %arg2: i32) -> (i32, i32) {
    %c0_i32 = arith.constant 0 : i32
    return %arg0, %arg1 : i32, i32
  }
}

</mosaic_0001>

<llo_original>
// kernel: tpu_custom_call.1
$region0: #{tpu_custom_call.1}
  #allocation0 [shape = 'u32[]', space=smem, size = 0x4, offset = 0x4, fixed_abs, tag = 'smem constant byte address 0x4 - core index']
  #allocation1 [shape = 'u32[144,128]{1,0:T(1,128)}', space=vmem, size = 0x12000, scoped, tag = 'internal scratch']
  #allocation2 [shape = 'f32[16,128]{1,0:T(8,128)}', space=vmem, size = 0x2000, scoped, tag = 'scratch operand']
  %s0 = inlined_call_operand.hbm [shape: f32[16,128], index: 0, kind: input, shape index: {}]
  %s1 = inlined_call_operand.hbm [shape: bf16[128,128], index: 1, kind: input, shape index: {}]
  %s2 = inlined_call_operand.vmem [shape: f32[1,128], index: 2, kind: input, shape index: {}]
  %s3 = inlined_call_operand.hbm [shape: f32[16,128], index: 3, kind: output, shape index: {}]
  %s4 = sld [smem:[#allocation0]]
  $region42: #{tpu_custom_call.1} parent=0
    _
  %s6 = ssub.s32 1, %s4
  %s7 = scalar_select 0, %s6, %s4
  $region1: #{tpu_custom_call.1} parent=0
    #allocation3 [shape = 'u8[8192]{0}', space=vmem, size = 0x2000, scoped, tag = 'input window, operand 0, single buffered']
    #allocation4 [shape = 's32[1]{0}', space=sflag, size = 0x4, scoped, tag = 'scoped memory for tpu_custom_call.1']
    #allocation5 [shape = 's32[1]{0}', space=sflag, size = 0x4, scoped, tag = 'scoped memory for tpu_custom_call.1']
    #allocation6 [shape = 'u8[32768]{0}', space=vmem, size = 0x8000, scoped, tag = 'input window, operand 1, single buffered']
    #allocation7 [shape = 's32[1]{0}', space=sflag, size = 0x4, scoped, tag = 'scoped memory for tpu_custom_call.1']
    #allocation8 [shape = 'u8[8192]{0}', space=vmem, size = 0x2000, scoped, tag = 'output window, operand 0, single buffered']
    %8 = vsyncpa [#allocation4], 0
    %9 = vsyncpa [#allocation7], 0
    %10 = vsyncpa [#allocation5], 0
    // Predicated region
    $region2: #{tpu_custom_call.1} parent=1 // pred_check
      _
    $region3: #{tpu_custom_call.1} parent=1 // pred_check_branch
      %12 = sbr.rel (0) target = $region5
    $region4: #{tpu_custom_call.1} parent=1 // pred_region
      %s14 = ssub.s32 256, 256
      %15 = vsyncadd [#allocation4], %s14
      %s16 = sshll.u32 [#allocation3], 4
      %s17 = int_to_ptr.vmem [resolvable:$true] %s16
      %22 = dma.hbm_to_vmem [thread:$0]  %s0, 256, %s17, [#allocation4], 128, 128, 8
    $region5: #{tpu_custom_call.1} parent=1 // pred_fallthru
      _
    // Predicated region
    $region6: #{tpu_custom_call.1} parent=1 // pred_check
      _
    $region7: #{tpu_custom_call.1} parent=1 // pred_check_branch
      %24 = sbr.rel (0) target = $region9
    $region8: #{tpu_custom_call.1} parent=1 // pred_region
      %s26 = ssub.s32 1024, 1024
      %27 = vsyncadd [#allocation7], %s26
      %s28 = sshll.u32 [#allocation6], 4
      %s29 = int_to_ptr.vmem [resolvable:$true] %s28
      %34 = dma.hbm_to_vmem [thread:$0]  %s1, 1024, %s29, [#allocation7], 64, 64, 4
    $region9: #{tpu_custom_call.1} parent=1 // pred_fallthru
      _
    // Predicated region
    $region10: #{tpu_custom_call.1} parent=1 // pred_check
      _
    $region11: #{tpu_custom_call.1} parent=1 // pred_check_branch
      %36 = sbr.rel (0) target = $region13
    $region12: #{tpu_custom_call.1} parent=1 // pred_region
      _
    $region13: #{tpu_custom_call.1} parent=1 // pred_fallthru
      _
    // Predicated region
    $region14: #{tpu_custom_call.1} parent=1 // pred_check
      _
    $region15: #{tpu_custom_call.1} parent=1 // pred_check_branch
      %38 = sbr.rel (0) target = $region17
    $region16: #{tpu_custom_call.1} parent=1 // pred_region
      %39 = dma.done [#allocation4], 256
    $region17: #{tpu_custom_call.1} parent=1 // pred_fallthru
      _
    // Predicated region
    $region18: #{tpu_custom_call.1} parent=1 // pred_check
      _
    $region19: #{tpu_custom_call.1} parent=1 // pred_check_branch
      %41 = sbr.rel (0) target = $region21
    $region20: #{tpu_custom_call.1} parent=1 // pred_region
      %42 = dma.done [#allocation7], 1024
    $region21: #{tpu_custom_call.1} parent=1 // pred_fallthru
      _
    %p44 = scmp.eq.s32.totalorder 0, 0
    // Predicated region
    $region22: #{tpu_custom_call.1} parent=1 // pred_check
      %p45 = pneg %p44
    $region23: #{tpu_custom_call.1} parent=1 // pred_check_branch
      %47 = sbr.rel (%p45) target = $region25
    $region24: #{tpu_custom_call.1} parent=1 // pred_region
      %48 = vst [vmem:[#allocation2] sm:$0xff] 0.0
      %49 = vst [vmem:[#allocation2 + $0x8] sm:$0xff] 0.0
    $region25: #{tpu_custom_call.1} parent=1 // pred_fallthru
      _
    %v50 = vld [vmem:[#allocation3] sm:$0xff]
    %v51 = vld [vmem:[#allocation3 + $0x8] sm:$0xff]
    %v52 = vld [vmem:[#allocation2] sm:$0xff]
    %v53 = vld [vmem:[#allocation2 + $0x8] sm:$0xff]
    %v54 = vpack.c.bf16 %v51, %v50
    %v55 = vld [vmem:[#allocation6] sm:$0xf]
    %v56 = vld [vmem:[#allocation6 + $0x4] sm:$0xf]
    %v57 = vld [vmem:[#allocation6 + $0x8] sm:$0xf]
    %v58 = vld [vmem:[#allocation6 + $0xc] sm:$0xf]
    %v59 = vld [vmem:[#allocation6 + $0x10] sm:$0xf]
    %v60 = vld [vmem:[#allocation6 + $0x14] sm:$0xf]
    %v61 = vld [vmem:[#allocation6 + $0x18] sm:$0xf]
    %v62 = vld [vmem:[#allocation6 + $0x1c] sm:$0xf]
    %v63 = vld [vmem:[#allocation6 + $0x20] sm:$0xf]
    %v64 = vld [vmem:[#allocation6 + $0x24] sm:$0xf]
    %v65 = vld [vmem:[#allocation6 + $0x28] sm:$0xf]
    %v66 = vld [vmem:[#allocation6 + $0x2c] sm:$0xf]
    %v67 = vld [vmem:[#allocation6 + $0x30] sm:$0xf]
    %v68 = vld [vmem:[#allocation6 + $0x34] sm:$0xf]
    %v69 = vld [vmem:[#allocation6 + $0x38] sm:$0xf]
    %v70 = vld [vmem:[#allocation6 + $0x3c] sm:$0xf]
    %v87 = vunpack.c.l.b16 %v55
    %v88 = vunpack.c.l.b16 %v56
    %v89 = vunpack.c.l.b16 %v57
    %v90 = vunpack.c.l.b16 %v58
    %v91 = vunpack.c.l.b16 %v59
    %v92 = vunpack.c.l.b16 %v60
    %v93 = vunpack.c.l.b16 %v61
    %v94 = vunpack.c.l.b16 %v62
    %v95 = vunpack.c.l.b16 %v63
    %v96 = vunpack.c.l.b16 %v64
    %v97 = vunpack.c.l.b16 %v65
    %v98 = vunpack.c.l.b16 %v66
    %v99 = vunpack.c.l.b16 %v67
    %v100 = vunpack.c.l.b16 %v68
    %v101 = vunpack.c.l.b16 %v69
    %v102 = vunpack.c.l.b16 %v70
    %v103 = vpack.c.b16 %v88, %v87
    %v104 = vpack.c.b16 %v90, %v89
    %v105 = vpack.c.b16 %v92, %v91
    %v106 = vpack.c.b16 %v94, %v93
    %v107 = vpack.c.b16 %v96, %v95
    %v108 = vpack.c.b16 %v98, %v97
    %v109 = vpack.c.b16 %v100, %v99
    %v110 = vpack.c.b16 %v102, %v101
    %119 = vmatprep.subr.bf16.mxu0 0
    %120 = vmatpush1.bf16.msra.mxu0 %v103
    %121 = vmatprep.subr.bf16.mxu0 0
    %122 = vmatpush1.bf16.msra.mxu0 %v104
    %123 = vmatprep.subr.bf16.mxu0 0
    %124 = vmatpush1.bf16.msra.mxu0 %v105
    %125 = vmatprep.subr.bf16.mxu0 0
    %126 = vmatpush1.bf16.msra.mxu0 %v106
    %127 = vmatprep.subr.bf16.mxu0 0
    %128 = vmatpush1.bf16.msra.mxu0 %v107
    %129 = vmatprep.subr.bf16.mxu0 0
    %130 = vmatpush1.bf16.msra.mxu0 %v108
    %131 = vmatprep.subr.bf16.mxu0 0
    %132 = vmatpush1.bf16.msra.mxu0 %v109
    %133 = vmatprep.subr.bf16.mxu0 0
    %134 = vmatpush1.bf16.msra.mxu0 %v110
    %135 = vmatprep.subr.bf16.mxu0 0
    %136 = vmatpush1.bf16.msra.mxu0 0
    %137 = vmatprep.subr.bf16.mxu0 0
    %138 = vmatpush1.bf16.msra.mxu0 0
    %139 = vmatprep.subr.bf16.mxu0 0
    %140 = vmatpush1.bf16.msra.mxu0 0
    %141 = vmatprep.subr.bf16.mxu0 0
    %142 = vmatpush1.bf16.msra.mxu0 0
    %143 = vmatprep.subr.bf16.mxu0 0
    %144 = vmatpush1.bf16.msra.mxu0 0
    %145 = vmatprep.subr.bf16.mxu0 0
    %146 = vmatpush1.bf16.msra.mxu0 0
    %147 = vmatprep.subr.bf16.mxu0 0
    %148 = vmatpush1.bf16.msra.mxu0 0
    %149 = vmatprep.subr.bf16.mxu0 0
    %150 = vmatpush1.bf16.msra.mxu0 0
    %151 = vmatprep.mubr.bf16.mxu0 0
    %152 = vmatmul.mubr.bf16.gmra.mrb[0].mxu0 %v54
    %v153 = vpop.f32.mrb[0].mxu0
    %v154 = vadd.f32 0.0, %v153
    %v155 = vpop.f32.mrb[0].mxu0
    %v156 = vpop.f32.mrb[0].mxu0
    %v157 = vadd.f32 0.0, %v156
    %v158 = vpop.f32.mrb[0].mxu0
    %159 = vdwg.mxu0
    %v160 = vadd.f32 %v52, %v154
    %v161 = vadd.f32 %v53, %v157
    %162 = vst [vmem:[#allocation2] sm:$0xff] %v160
    %163 = vst [vmem:[#allocation2 + $0x8] sm:$0xff] %v161
    %p164 = scmp.eq.s32.totalorder 0, 0
    // Predicated region
    $region26: #{tpu_custom_call.1} parent=1 // pred_check
      %p165 = pneg %p164
    $region27: #{tpu_custom_call.1} parent=1 // pred_check_branch
      %167 = sbr.rel (%p165) target = $region29
    $region28: #{tpu_custom_call.1} parent=1 // pred_region
      %v168 = vld [vmem:[#allocation2] sm:$0xff]
      %v169 = vld [vmem:[#allocation2 + $0x8] sm:$0xff]
      %v170 = vadd.f32 %v168, %v50
      %v171 = vadd.f32 %v169, %v51
      %172 = vst [vmem:[#allocation2] sm:$0xff] %v170
      %173 = vst [vmem:[#allocation2 + $0x8] sm:$0xff] %v171
    $region29: #{tpu_custom_call.1} parent=1 // pred_fallthru
      _
    // Predicated region
    $region30: #{tpu_custom_call.1} parent=1 // pred_check
      %p174 = pneg %p44
    $region31: #{tpu_custom_call.1} parent=1 // pred_check_branch
      %176 = sbr.rel (%p174) target = $region33
    $region32: #{tpu_custom_call.1} parent=1 // pred_region
      %v177 = vld [vmem:[#allocation2] sm:$0xff]
      %v178 = vld [vmem:[#allocation2 + $0x8] sm:$0xff]
      %v179 = vld [vmem:[%s2] sm:$0x1]
      %v181 = vlaneseq
      %v182 = vshrl.u32 %v181, 7
      %v183 = vsub.s32 0, %v182
      %v184 = vrot.slane %v179, %v183
      %v186 = vadd.f32 %v177, %v184
      %v187 = vadd.f32 %v178, %v184
      %188 = vst [vmem:[#allocation8] sm:$0xff] %v186
      %189 = vst [vmem:[#allocation8 + $0x8] sm:$0xff] %v187
    $region33: #{tpu_custom_call.1} parent=1 // pred_fallthru
      _
    // Predicated region
    $region34: #{tpu_custom_call.1} parent=1 // pred_check
      _
    $region35: #{tpu_custom_call.1} parent=1 // pred_check_branch
      %191 = sbr.rel (0) target = $region37
    $region36: #{tpu_custom_call.1} parent=1 // pred_region
      %s193 = ssub.s32 256, 256
      %194 = vsyncadd [#allocation5], %s193
      %s195 = sshll.u32 [#allocation8], 4
      %s196 = int_to_ptr.vmem [resolvable:$true] %s195
      %201 = dma.vmem_to_hbm [thread:$0]  %s196, 256, %s3, [#allocation5], 128, 128, 8
    $region37: #{tpu_custom_call.1} parent=1 // pred_fallthru
      _
    // Predicated region
    $region38: #{tpu_custom_call.1} parent=1 // pred_check
      _
    $region39: #{tpu_custom_call.1} parent=1 // pred_check_branch
      %203 = sbr.rel (0) target = $region41
    $region40: #{tpu_custom_call.1} parent=1 // pred_region
      %204 = dma.done [#allocation5], 256
    $region41: #{tpu_custom_call.1} parent=1 // pred_fallthru
      _
    %205 = vsyncpa [#allocation4], 1
    %206 = vsyncpa [#allocation7], 1
    %207 = vsyncpa [#allocation5], 1

</llo_original>
